<compile_context>
chip_gen: v7x
topology: tpu7x:2x2x1
jax: 0.10.0
libtpu: 0.0.40
codegen_flags: <defaults>
</compile_context>

<pallas_src>
import math
from functools import partial

import jax
import jax.numpy as jnp
from jax.experimental import pallas as pl
from jax.experimental.pallas import tpu as pltpu


# ----------------------------------------------------------------------------
# Kernel 1: LayerNorm + triangle-bias projection -> (H, I*J) lane-dense slab.
# ----------------------------------------------------------------------------
def ln_tri_kernel(x_ref, gamma_ref, beta_ref, wtri_t_ref, tri_ref, *, eps):
    x = x_ref[...].astype(jnp.float32)                       # (N, C)
    mu = jnp.mean(x, axis=-1, keepdims=True)
    var = jnp.mean((x - mu) ** 2, axis=-1, keepdims=True)
    xln = (x - mu) * jax.lax.rsqrt(var + eps)
    xln = xln * gamma_ref[...] + beta_ref[...]               # (1, C) broadcasts
    # (H, C) . (N, C)^T -> (H, N): contraction over C, lane dim = N (dense).
    tri = jax.lax.dot_general(
        wtri_t_ref[...], xln.astype(jnp.bfloat16),
        dimension_numbers=(((1,), (1,)), ((), ())),
        preferred_element_type=jnp.float32)
    tri_ref[...] = tri.astype(tri_ref.dtype)


# ----------------------------------------------------------------------------
# Kernel 2: gated multi-head attention with mask bias + resident triangle bias.
# grid = (row_blocks,); heads and kv tiles are static in-kernel loops.
# ----------------------------------------------------------------------------
def attn_kernel(x_ref, gamma_ref, beta_ref, mbias_ref, tri_ref,
                w_qkvg_ref, bg_ref, wo_ref, bo_ref, out_ref,
                *, eps, num_heads, head_dim, kv_block):
    H, D = num_heads, head_dim
    Bi, J, C = x_ref.shape
    n_kv = J // kv_block

    # LayerNorm once per row block (recomputed from x: no xln HBM round trip).
    x = x_ref[...].astype(jnp.float32)                       # (Bi, J, C)
    mu = jnp.mean(x, axis=-1, keepdims=True)
    var = jnp.mean((x - mu) ** 2, axis=-1, keepdims=True)
    xln = (x - mu) * jax.lax.rsqrt(var + eps)
    xln = (xln * gamma_ref[...][None] + beta_ref[...][None]).astype(jnp.bfloat16)

    # Cross-head fused q|k|v|g projection: ONE (Bi*J, C) x (C, H*4D) matmul.
    # 1/sqrt(D) is already folded into the q columns on the host.
    proj = jnp.einsum("bjc,cn->bjn", xln, w_qkvg_ref[...],
                      preferred_element_type=jnp.float32
                      ).astype(jnp.bfloat16)                 # (Bi, J, H*4D)

    mbias = mbias_ref[...].astype(jnp.float32)               # (Bi, 1, J)

    og_parts = []
    for h in range(H):                                       # static unroll
        base = 4 * D * h   # head-major packing: [q_h | k_h | v_h | g_h]
        # TODO(synk): D=32 lane slices may force XLU relayouts; if vrot/copy
        # shows up in the bundle, stage proj into a head-split VMEM scratch.
        q = proj[:, :, base + 0 * D: base + 1 * D]           # (Bi, J, D) bf16
        tri_h = tri_ref[h]                                   # (I, J) bf16, resident

        # Flash-style online softmax over kv tiles (bounds f32 logits live set).
        m_run = jnp.full((Bi, J, 1), -1e30, jnp.float32)
        l_run = jnp.zeros((Bi, J, 1), jnp.float32)
        acc = jnp.zeros((Bi, J, D), jnp.float32)
        for t in range(n_kv):                                # static unroll
            ks = t * kv_block
            k_t = proj[:, ks:ks + kv_block, base + 1 * D: base + 2 * D]
            v_t = proj[:, ks:ks + kv_block, base + 2 * D: base + 3 * D]
            s = jnp.einsum("bqd,bkd->bqk", q, k_t,
                           preferred_element_type=jnp.float32)   # (Bi, J, kv)
            s = s + mbias[:, :, ks:ks + kv_block] \
                  + tri_h[:, ks:ks + kv_block].astype(jnp.float32)[None]
            m_new = jnp.maximum(m_run, jnp.max(s, axis=-1, keepdims=True))
            alpha = jnp.exp(m_run - m_new)
            # TODO(synk): on v6e/v7x exp in bf16 doubles EUP throughput; kept
            # f32 here so one kernel is numerically safe on v5e as well.
            p = jnp.exp(s - m_new)
            l_run = alpha * l_run + jnp.sum(p, axis=-1, keepdims=True)
            acc = alpha * acc + jnp.einsum("bqk,bkd->bqd",
                                           p.astype(jnp.bfloat16), v_t,
                                           preferred_element_type=jnp.float32)
            m_run = m_new
        o = acc * pl.reciprocal(l_run, approx=True)          # (Bi, J, D) f32

        g_lin = proj[:, :, base + 3 * D: base + 4 * D].astype(jnp.float32)
        gate = jax.nn.sigmoid(g_lin + bg_ref[h])             # (1, D) broadcasts
        og_parts.append((o * gate).astype(jnp.bfloat16))

    og = jnp.concatenate(og_parts, axis=-1)                  # (Bi, J, H*D) bf16
    # Cross-head fused output projection, written straight to out_ref (no
    # accumulator scratch needed since all heads finish in this grid step).
    out = jnp.einsum("bjn,nc->bjc", og, wo_ref[...],
                     preferred_element_type=jnp.float32)
    out_ref[...] = (out + bo_ref[...][None]).astype(out_ref.dtype)


# ----------------------------------------------------------------------------
# Host-side helpers.
# ----------------------------------------------------------------------------
def _pick_kv_block(j, cap=512):
    if j <= cap:
        return j
    for r in (512, 384, 256, 128):
        if j % r == 0:
            return r
    return j


def _pick_k1_rows(total, cap=4096):
    if total <= cap:
        return total
    r = (cap // 128) * 128
    while r >= 128:
        if total % r == 0:
            return r
        r -= 128
    return total


def _vmem_limit_bytes():
    # ~3/4 of physical VMEM: ~96 MiB on v5e/v6e (128 MiB), ~48 MiB on v7x (64 MiB).
    try:
        cap = int(pltpu.get_tpu_info().vmem_capacity_bytes)
    except Exception:
        cap = 128 * 1024 * 1024
    return int(min(cap * 3 // 4, 96 * 1024 * 1024))


# ----------------------------------------------------------------------------
# Wrapper: transposes, default mask, weight fusion, pallas_call plumbing.
# ----------------------------------------------------------------------------
def triangle_attention(x, params, mask=None, *, starting, inf=1e9, eps=1e-5,
                       block_rows=8, kv_block=None):
    if mask is None:
        mask = jnp.ones(x.shape[:-1], dtype=x.dtype)
    # TODO(synk): fold the ending-node (I, J) swap into the BlockSpec index
    # maps instead of materializing full-tensor HBM transposes.
    if not starting:
        x = jnp.swapaxes(x, -2, -3)
        mask = jnp.swapaxes(mask, -1, -2)

    I, J, C = x.shape
    H, _, D = params["wq"].shape
    assert I == J, "triangle bias broadcast requires a square pair rep"
    # Note: on v7x at large J prefer block_rows=4 to stay within 64 MiB VMEM.
    block_rows = min(block_rows, I)
    assert I % block_rows == 0
    nblk = I // block_rows
    if kv_block is None:
        kv_block = _pick_kv_block(J)
    assert J % kv_block == 0

    f32 = jnp.float32
    gamma = params["ln_gamma"].reshape(1, C).astype(f32)
    beta = params["ln_beta"].reshape(1, C).astype(f32)
    wtri_t = params["w_tri"].T.astype(jnp.bfloat16)                   # (H, C)
    # Head-major fused [q_h | k_h | v_h | g_h] columns (4*D = one 128-lane group
    # when D == 32); 1/sqrt(D) folded into the q columns.
    wq = params["wq"] * (1.0 / math.sqrt(D))
    w_qkvg = jnp.concatenate(
        [jnp.concatenate([wq[h], params["wk"][h], params["wv"][h],
                          params["wg"][h]], axis=-1) for h in range(H)],
        axis=-1).astype(jnp.bfloat16)                                  # (C, H*4D)
    bg = params["bg"].astype(f32)                                      # (H, 1, D)
    wo = params["wo"].reshape(H * D, C).astype(jnp.bfloat16)           # (H*D, C)
    bo = params["bo"].reshape(1, C).astype(f32)                        # (1, C)

    # Mask bias hoisted out of the kernel (one fewer per-step VPU pass).
    mbias = (inf * (mask.astype(f32) - 1.0)).reshape(I, 1, J)

    vmem_limit = _vmem_limit_bytes()

    # ---- Kernel 1: LayerNorm + triangle-bias projection ---------------------
    n1 = _pick_k1_rows(I * J)
    tri_flat = pl.pallas_call(
        partial(ln_tri_kernel, eps=eps),
        grid=((I * J) // n1,),
        in_specs=[
            pl.BlockSpec((n1, C), lambda i: (i, 0)),
            pl.BlockSpec((1, C), lambda i: (0, 0)),
            pl.BlockSpec((1, C), lambda i: (0, 0)),
            pl.BlockSpec((H, C), lambda i: (0, 0)),
        ],
        out_specs=pl.BlockSpec((H, n1), lambda i: (0, i)),
        out_shape=jax.ShapeDtypeStruct((H, I * J), jnp.bfloat16),
        compiler_params=pltpu.CompilerParams(
            dimension_semantics=("parallel",),
            vmem_limit_bytes=vmem_limit),
    )(x.reshape(I * J, C), gamma, beta, wtri_t)

    # TODO(synk): `gather(triangle_bias, dim=0)` is a model-parallel all-gather;
    # on a single device it is the identity (comm_dtype cast is a no-op here).
    tri = tri_flat.reshape(H, I, J)   # free row-major reshape, no HBM transpose

    # ---- Kernel 2: gated MHA with mask + resident triangle biases -----------
    out = pl.pallas_call(
        partial(attn_kernel, eps=eps, num_heads=H, head_dim=D,
                kv_block=kv_block),
        grid=(nblk,),
        in_specs=[
            pl.BlockSpec((block_rows, J, C), lambda i: (i, 0, 0)),   # x
            pl.BlockSpec((1, C), lambda i: (0, 0)),                  # gamma
            pl.BlockSpec((1, C), lambda i: (0, 0)),                  # beta
            pl.BlockSpec((block_rows, 1, J), lambda i: (i, 0, 0)),   # mask bias
            pl.BlockSpec((H, I, J), lambda i: (0, 0, 0)),            # tri resident
            pl.BlockSpec((C, 4 * H * D), lambda i: (0, 0)),          # w_qkvg
            pl.BlockSpec((H, 1, D), lambda i: (0, 0, 0)),            # bg
            pl.BlockSpec((H * D, C), lambda i: (0, 0)),              # wo (fused)
            pl.BlockSpec((1, C), lambda i: (0, 0)),                  # bo
        ],
        out_specs=pl.BlockSpec((block_rows, J, C), lambda i: (i, 0, 0)),
        out_shape=jax.ShapeDtypeStruct((I, J, C), x.dtype),
        compiler_params=pltpu.CompilerParams(
            dimension_semantics=("parallel",),
            vmem_limit_bytes=vmem_limit),
    )(x, gamma, beta, mbias, tri, w_qkvg, bg, wo, bo)

    if not starting:
        out = jnp.swapaxes(out, -2, -3)
    return out


# ----------------------------------------------------------------------------
# Pure-JAX reference (mirrors the PyTorch forward) for verification.
# ----------------------------------------------------------------------------
def reference_forward(x, params, mask=None, *, starting, inf=1e9, eps=1e-5):
    if mask is None:
        mask = jnp.ones(x.shape[:-1], dtype=x.dtype)
    if not starting:
        x = jnp.swapaxes(x, -2, -3)
        mask = jnp.swapaxes(mask, -1, -2)
    C = x.shape[-1]
    H, _, D = params["wq"].shape

    mu = jnp.mean(x, -1, keepdims=True)
    var = jnp.mean((x - mu) ** 2, -1, keepdims=True)
    xln = (x - mu) / jnp.sqrt(var + eps) * params["ln_gamma"] + params["ln_beta"]

    tri = jnp.einsum("ijc,ch->hij", xln, params["w_tri"])        # (H, I, J)
    mask_bias = inf * (mask - 1.0)                               # (I, J)

    q = jnp.einsum("ijc,hcd->ihjd", xln, params["wq"]) / math.sqrt(D)
    k = jnp.einsum("ijc,hcd->ihjd", xln, params["wk"])
    v = jnp.einsum("ijc,hcd->ihjd", xln, params["wv"])

    logits = jnp.einsum("ihqd,ihkd->ihqk", q, k)
    logits = logits + mask_bias[:, None, None, :] + tri[None, :, :, :]
    a = jax.nn.softmax(logits, axis=-1)
    o = jnp.einsum("ihqk,ihkd->iqhd", a, v)                      # (I, J, H, D)

    g = jax.nn.sigmoid(jnp.einsum("ijc,hcd->ijhd", xln, params["wg"])
                       + params["bg"].reshape(1, 1, H, D))
    o = o * g
    out = jnp.einsum("ijhd,hdc->ijc", o, params["wo"]) + params["bo"].reshape(1, 1, C)

    if not starting:
        out = jnp.swapaxes(out, -2, -3)
    return out


# ----------------------------------------------------------------------------
if __name__ == "__main__":
    I = J = 16     # pair representation is square (required by triangle bias)
    C = 32         # c_in
    H = 4          # no_heads
    D = 32         # c_hidden (per-head)

    key = jax.random.PRNGKey(0)
    keys = jax.random.split(key, 12)

    x = jax.random.normal(keys[0], (I, J, C), jnp.float32)
    mask = (jax.random.uniform(keys[1], (I, J)) > 0.3).astype(jnp.float32)
    mask = jnp.maximum(mask, jnp.eye(I, dtype=jnp.float32))  # >=1 valid key/row

    # Deterministic synthetic parameters (shapes from the module's __init__).
    params = dict(
        ln_gamma=1.0 + 0.1 * jax.random.normal(keys[2], (C,), jnp.float32),
        ln_beta=0.1 * jax.random.normal(keys[3], (C,), jnp.float32),
        w_tri=0.1 * jax.random.normal(keys[4], (C, H), jnp.float32),   # Linear(c_in, H, bias=False)
        wq=0.1 * jax.random.normal(keys[5], (H, C, D), jnp.float32),   # linear_q (no bias)
        wk=0.1 * jax.random.normal(keys[6], (H, C, D), jnp.float32),   # linear_k (no bias)
        wv=0.1 * jax.random.normal(keys[7], (H, C, D), jnp.float32),   # linear_v (no bias)
        wg=0.1 * jax.random.normal(keys[8], (H, C, D), jnp.float32),   # linear_g weight
        bg=0.1 * jax.random.normal(keys[9], (H, 1, D), jnp.float32),   # linear_g bias
        wo=0.1 * jax.random.normal(keys[10], (H, D, C), jnp.float32),  # linear_o weight
        bo=0.1 * jax.random.normal(keys[11], (1, C), jnp.float32),     # linear_o bias
    )

    out = triangle_attention(x, params, mask=mask, starting=False)
    out = jax.block_until_ready(out)

    ref = reference_forward(x, params, mask=mask, starting=False)
    assert out.shape == (I, J, C)
    max_err = float(jnp.max(jnp.abs(out - ref)))
    assert max_err < 5e-2, f"max abs err too large: {max_err}"

    print("KERNEL_OK")
</pallas_src>

<mosaic_0001>
module attributes {stable_mosaic.version = 11 : i64} {
  func.func @ln_tri_kernel(%arg0: i32, %arg1: memref<256x32xf32, #tpu.memory_space<vmem>>, %arg2: memref<1x32xf32, #tpu.memory_space<vmem>>, %arg3: memref<1x32xf32, #tpu.memory_space<vmem>>, %arg4: memref<4x32xbf16, #tpu.memory_space<vmem>>, %arg5: memref<4x256xbf16, #tpu.memory_space<vmem>>) attributes {dimension_semantics = [#tpu.dimension_semantics<parallel>], iteration_bounds = array<i64: 1>, scalar_prefetch = 0 : i64, scratch_operands = 0 : i64, tpu.core_type = #tpu.core_type<tc>, window_params = [{transform_indices = @transform_0, window_bounds = array<i64: 256, 32>}, {pipeline_mode = #tpu.pipeline_mode<synchronous>, transform_indices = @transform_1, window_bounds = array<i64: 1, 32>}, {pipeline_mode = #tpu.pipeline_mode<synchronous>, transform_indices = @transform_2, window_bounds = array<i64: 1, 32>}, {pipeline_mode = #tpu.pipeline_mode<synchronous>, transform_indices = @transform_3, window_bounds = array<i64: 4, 32>}, {transform_indices = @transform_4, window_bounds = array<i64: 4, 256>}]} {
    %c0 = arith.constant 0 : index
    %c0_0 = arith.constant 0 : index
    %0 = vector.load %arg1[%c0, %c0_0] : memref<256x32xf32, #tpu.memory_space<vmem>>, vector<256x32xf32>
    %cst = arith.constant dense<0.000000e+00> : vector<256xf32>
    %1 = vector.multi_reduction <add>, %0, %cst [1] : vector<256x32xf32> to vector<256xf32>
    %2 = vector.shape_cast %1 : vector<256xf32> to vector<256x1xf32>
    %cst_1 = arith.constant 3.200000e+01 : f32
    %3 = vector.broadcast %cst_1 : f32 to vector<256x1xf32>
    %4 = arith.divf %2, %3 : vector<256x1xf32>
    %5 = vector.broadcast %4 : vector<256x1xf32> to vector<256x32xf32>
    %6 = arith.subf %0, %5 : vector<256x32xf32>
    %7 = arith.mulf %6, %6 : vector<256x32xf32>
    %cst_2 = arith.constant dense<0.000000e+00> : vector<256xf32>
    %8 = vector.multi_reduction <add>, %7, %cst_2 [1] : vector<256x32xf32> to vector<256xf32>
    %9 = vector.shape_cast %8 : vector<256xf32> to vector<256x1xf32>
    %cst_3 = arith.constant 3.200000e+01 : f32
    %10 = vector.broadcast %cst_3 : f32 to vector<256x1xf32>
    %11 = arith.divf %9, %10 : vector<256x1xf32>
    %12 = vector.broadcast %4 : vector<256x1xf32> to vector<256x32xf32>
    %13 = arith.subf %0, %12 : vector<256x32xf32>
    %cst_4 = arith.constant 9.99999974E-6 : f32
    %14 = vector.broadcast %cst_4 : f32 to vector<256x1xf32>
    %15 = arith.addf %11, %14 : vector<256x1xf32>
    %16 = math.rsqrt %15 : vector<256x1xf32>
    %17 = vector.broadcast %16 : vector<256x1xf32> to vector<256x32xf32>
    %18 = arith.mulf %13, %17 : vector<256x32xf32>
    %c0_5 = arith.constant 0 : index
    %c0_6 = arith.constant 0 : index
    %19 = vector.load %arg2[%c0_5, %c0_6] : memref<1x32xf32, #tpu.memory_space<vmem>>, vector<1x32xf32>
    %20 = vector.broadcast %19 : vector<1x32xf32> to vector<256x32xf32>
    %21 = arith.mulf %18, %20 : vector<256x32xf32>
    %c0_7 = arith.constant 0 : index
    %c0_8 = arith.constant 0 : index
    %22 = vector.load %arg3[%c0_7, %c0_8] : memref<1x32xf32, #tpu.memory_space<vmem>>, vector<1x32xf32>
    %23 = vector.broadcast %22 : vector<1x32xf32> to vector<256x32xf32>
    %24 = arith.addf %21, %23 : vector<256x32xf32>
    %c0_9 = arith.constant 0 : index
    %c0_10 = arith.constant 0 : index
    %25 = vector.load %arg4[%c0_9, %c0_10] : memref<4x32xbf16, #tpu.memory_space<vmem>>, vector<4x32xbf16>
    %26 = arith.truncf %24 : vector<256x32xf32> to vector<256x32xbf16>
    %cst_11 = arith.constant dense<0.000000e+00> : vector<4x256xf32>
    %27 = tpu.matmul %25, %26, %cst_11 {dimension_numbers = #tpu.dot_dimension_numbers<[1], [1], [0], [0], [0, 0, 1, 0], [], []>} : vector<4x32xbf16>, vector<256x32xbf16>, vector<4x256xf32> -> vector<4x256xf32>
    %28 = arith.truncf %27 : vector<4x256xf32> to vector<4x256xbf16>
    %c0_12 = arith.constant 0 : index
    %c0_13 = arith.constant 0 : index
    %29 = vector.load %arg5[%c0_12, %c0_13] : memref<4x256xbf16, #tpu.memory_space<vmem>>, vector<4x256xbf16>
    tpu.vector_store %arg5[%c0_12, %c0_13], %28 {strides = array<i32>} : memref<4x256xbf16, #tpu.memory_space<vmem>>, vector<4x256xbf16>,
    return
  }
  func.func @transform_0(%arg0: i32) -> (i32, i32) {
    %c0_i32 = arith.constant 0 : i32
    %c0_i32_0 = arith.constant 0 : i32
    return %arg0, %c0_i32 : i32, i32
  }
  func.func @transform_1(%arg0: i32) -> (i32, i32) {
    %c0_i32 = arith.constant 0 : i32
    %c0_i32_0 = arith.constant 0 : i32
    %c0_i32_1 = arith.constant 0 : i32
    return %c0_i32, %c0_i32_0 : i32, i32
  }
  func.func @transform_2(%arg0: i32) -> (i32, i32) {
    %c0_i32 = arith.constant 0 : i32
    %c0_i32_0 = arith.constant 0 : i32
    %c0_i32_1 = arith.constant 0 : i32
    return %c0_i32, %c0_i32_0 : i32, i32
  }
  func.func @transform_3(%arg0: i32) -> (i32, i32) {
    %c0_i32 = arith.constant 0 : i32
    %c0_i32_0 = arith.constant 0 : i32
    %c0_i32_1 = arith.constant 0 : i32
    return %c0_i32, %c0_i32_0 : i32, i32
  }
  func.func @transform_4(%arg0: i32) -> (i32, i32) {
    %c0_i32 = arith.constant 0 : i32
    %c0_i32_0 = arith.constant 0 : i32
    return %c0_i32, %arg0 : i32, i32
  }
}

</mosaic_0001>

<llo_original>
// kernel: tpu_custom_call.1
$region0: #{tpu_custom_call.1}
  #allocation0 [shape = 'u32[]', space=smem, size = 0x4, offset = 0x4, fixed_abs, tag = 'smem constant byte address 0x4 - core index']
  #allocation1 [shape = 'u32[144,128]{1,0:T(1,128)}', space=vmem, size = 0x12000, scoped, tag = 'internal scratch']
  %s0 = inlined_call_operand.hbm [shape: f32[256,32], index: 0, kind: input, shape index: {}]
  %s1 = inlined_call_operand.hbm [shape: f32[1,32], index: 1, kind: input, shape index: {}]
  %s2 = inlined_call_operand.hbm [shape: f32[1,32], index: 2, kind: input, shape index: {}]
  %s3 = inlined_call_operand.hbm [shape: bf16[4,32], index: 3, kind: input, shape index: {}]
  %s4 = inlined_call_operand.hbm [shape: bf16[4,256], index: 4, kind: output, shape index: {}]
  %s5 = sld [smem:[#allocation0]]
  $region42: #{tpu_custom_call.1} parent=0
    _
  %s7 = ssub.s32 1, %s5
  %s8 = scalar_select 0, %s7, %s5
  $region1: #{tpu_custom_call.1} parent=0
    #allocation2 [shape = 'u8[131072]{0}', space=vmem, size = 0x20000, scoped, tag = 'input window, operand 0, single buffered']
    #allocation3 [shape = 's32[1]{0}', space=sflag, size = 0x4, scoped, tag = 'scoped memory for tpu_custom_call.1']
    #allocation4 [shape = 's32[1]{0}', space=sflag, size = 0x4, scoped, tag = 'scoped memory for tpu_custom_call.1']
    #allocation5 [shape = 'u8[512]{0}', space=vmem, size = 0x400, scoped, tag = 'input window, operand 1, single buffered']
    #allocation6 [shape = 's32[1]{0}', space=sflag, size = 0x4, scoped, tag = 'scoped memory for tpu_custom_call.1']
    #allocation7 [shape = 'u8[512]{0}', space=vmem, size = 0x400, scoped, tag = 'input window, operand 2, single buffered']
    #allocation8 [shape = 'u8[1024]{0}', space=vmem, size = 0x400, scoped, tag = 'input window, operand 3, single buffered']
    #allocation9 [shape = 's32[1]{0}', space=sflag, size = 0x4, scoped, tag = 'scoped memory for tpu_custom_call.1']
    #allocation10 [shape = 'u8[2048]{0}', space=vmem, size = 0x800, scoped, tag = 'output window, operand 0, single buffered']
    %9 = vsyncpa [#allocation3], 0
    %10 = vsyncpa [#allocation6], 0
    %11 = vsyncpa [#allocation9], 0
    %12 = vsyncpa [#allocation4], 0
    // Predicated region
    $region2: #{tpu_custom_call.1} parent=1 // pred_check
      _
    $region3: #{tpu_custom_call.1} parent=1 // pred_check_branch
      %14 = sbr.rel (0) target = $region5
    $region4: #{tpu_custom_call.1} parent=1 // pred_region
      %s16 = ssub.s32 4096, 4096
      %17 = vsyncadd [#allocation3], %s16
      %s18 = sshll.u32 [#allocation2], 4
      %s19 = int_to_ptr.vmem [resolvable:$true] %s18
      %24 = dma.hbm_to_vmem [thread:$0]  %s0, 4096, %s19, [#allocation3], 128, 128, 8
    $region5: #{tpu_custom_call.1} parent=1 // pred_fallthru
      _
    // Predicated region
    $region6: #{tpu_custom_call.1} parent=1 // pred_check
      _
    $region7: #{tpu_custom_call.1} parent=1 // pred_check_branch
      %26 = sbr.rel (0) target = $region9
    $region8: #{tpu_custom_call.1} parent=1 // pred_region
      %s28 = ssub.s32 16, 16
      %29 = vsyncadd [#allocation6], %s28
      %s31 = sshll.u32 [#allocation5], 4
      %s32 = int_to_ptr.vmem [resolvable:$true] %s31
      %34 = dma.hbm_to_vmem [thread:$0]  %s1, 16, %s32, [#allocation6]
    $region9: #{tpu_custom_call.1} parent=1 // pred_fallthru
      _
    // Predicated region
    $region10: #{tpu_custom_call.1} parent=1 // pred_check
      _
    $region11: #{tpu_custom_call.1} parent=1 // pred_check_branch
      %36 = sbr.rel (0) target = $region13
    $region12: #{tpu_custom_call.1} parent=1 // pred_region
      %s38 = ssub.s32 16, 16
      %39 = vsyncadd [#allocation6], %s38
      %s41 = sshll.u32 [#allocation7], 4
      %s42 = int_to_ptr.vmem [resolvable:$true] %s41
      %44 = dma.hbm_to_vmem [thread:$0]  %s2, 16, %s42, [#allocation6]
    $region13: #{tpu_custom_call.1} parent=1 // pred_fallthru
      _
    // Predicated region
    $region14: #{tpu_custom_call.1} parent=1 // pred_check
      _
    $region15: #{tpu_custom_call.1} parent=1 // pred_check_branch
      %46 = sbr.rel (0) target = $region17
    $region16: #{tpu_custom_call.1} parent=1 // pred_region
      %s48 = ssub.s32 32, 32
      %49 = vsyncadd [#allocation9], %s48
      %s51 = sshll.u32 [#allocation8], 4
      %s52 = int_to_ptr.vmem [resolvable:$true] %s51
      %54 = dma.hbm_to_vmem [thread:$0]  %s3, 32, %s52, [#allocation9]
    $region17: #{tpu_custom_call.1} parent=1 // pred_fallthru
      _
    // Predicated region
    $region18: #{tpu_custom_call.1} parent=1 // pred_check
      _
    $region19: #{tpu_custom_call.1} parent=1 // pred_check_branch
      %56 = sbr.rel (0) target = $region21
    $region20: #{tpu_custom_call.1} parent=1 // pred_region
      %57 = dma.done [#allocation3], 4096
    $region21: #{tpu_custom_call.1} parent=1 // pred_fallthru
      _
    // Predicated region
    $region22: #{tpu_custom_call.1} parent=1 // pred_check
      _
    $region23: #{tpu_custom_call.1} parent=1 // pred_check_branch
      %59 = sbr.rel (0) target = $region25
    $region24: #{tpu_custom_call.1} parent=1 // pred_region
      %60 = dma.done [#allocation6], 16
    $region25: #{tpu_custom_call.1} parent=1 // pred_fallthru
      _
    // Predicated region
    $region26: #{tpu_custom_call.1} parent=1 // pred_check
      _
    $region27: #{tpu_custom_call.1} parent=1 // pred_check_branch
      %62 = sbr.rel (0) target = $region29
    $region28: #{tpu_custom_call.1} parent=1 // pred_region
      %63 = dma.done [#allocation6], 16
    $region29: #{tpu_custom_call.1} parent=1 // pred_fallthru
      _
    // Predicated region
    $region30: #{tpu_custom_call.1} parent=1 // pred_check
      _
    $region31: #{tpu_custom_call.1} parent=1 // pred_check_branch
      %65 = sbr.rel (0) target = $region33
    $region32: #{tpu_custom_call.1} parent=1 // pred_region
      %66 = dma.done [#allocation9], 32
    $region33: #{tpu_custom_call.1} parent=1 // pred_fallthru
      _
    %v68 = vld [vmem:[#allocation2] sm:$0xff]
    %v69 = vld [vmem:[#allocation2 + $0x8] sm:$0xff]
    %v70 = vld [vmem:[#allocation2 + $0x10] sm:$0xff]
    %v71 = vld [vmem:[#allocation2 + $0x18] sm:$0xff]
    %v72 = vld [vmem:[#allocation2 + $0x20] sm:$0xff]
    %v73 = vld [vmem:[#allocation2 + $0x28] sm:$0xff]
    %v74 = vld [vmem:[#allocation2 + $0x30] sm:$0xff]
    %v75 = vld [vmem:[#allocation2 + $0x38] sm:$0xff]
    %v76 = vld [vmem:[#allocation2 + $0x40] sm:$0xff]
    %v77 = vld [vmem:[#allocation2 + $0x48] sm:$0xff]
    %v78 = vld [vmem:[#allocation2 + $0x50] sm:$0xff]
    %v79 = vld [vmem:[#allocation2 + $0x58] sm:$0xff]
    %v80 = vld [vmem:[#allocation2 + $0x60] sm:$0xff]
    %v81 = vld [vmem:[#allocation2 + $0x68] sm:$0xff]
    %v82 = vld [vmem:[#allocation2 + $0x70] sm:$0xff]
    %v83 = vld [vmem:[#allocation2 + $0x78] sm:$0xff]
    %v84 = vld [vmem:[#allocation2 + $0x80] sm:$0xff]
    %v85 = vld [vmem:[#allocation2 + $0x88] sm:$0xff]
    %v86 = vld [vmem:[#allocation2 + $0x90] sm:$0xff]
    %v87 = vld [vmem:[#allocation2 + $0x98] sm:$0xff]
    %v88 = vld [vmem:[#allocation2 + $0xa0] sm:$0xff]
    %v89 = vld [vmem:[#allocation2 + $0xa8] sm:$0xff]
    %v90 = vld [vmem:[#allocation2 + $0xb0] sm:$0xff]
    %v91 = vld [vmem:[#allocation2 + $0xb8] sm:$0xff]
    %v92 = vld [vmem:[#allocation2 + $0xc0] sm:$0xff]
    %v93 = vld [vmem:[#allocation2 + $0xc8] sm:$0xff]
    %v94 = vld [vmem:[#allocation2 + $0xd0] sm:$0xff]
    %v95 = vld [vmem:[#allocation2 + $0xd8] sm:$0xff]
    %v96 = vld [vmem:[#allocation2 + $0xe0] sm:$0xff]
    %v97 = vld [vmem:[#allocation2 + $0xe8] sm:$0xff]
    %v98 = vld [vmem:[#allocation2 + $0xf0] sm:$0xff]
    %v99 = vld [vmem:[#allocation2 + $0xf8] sm:$0xff]
    %vm100 = vcmask 261120
    %v101 = vsel %vm100, %v68, 0.0
    %102 = vadd.xlane.f32.xlu0 %v101
    %v103 = vpop.xlane.xlu0 %102
    %v104 = vsel %vm100, %v69, 0.0
    %105 = vadd.xlane.f32.xlu0 %v104
    %v106 = vpop.xlane.xlu0 %105
    %v107 = vsel %vm100, %v70, 0.0
    %108 = vadd.xlane.f32.xlu0 %v107
    %v109 = vpop.xlane.xlu0 %108
    %v110 = vsel %vm100, %v71, 0.0
    %111 = vadd.xlane.f32.xlu0 %v110
    %v112 = vpop.xlane.xlu0 %111
    %v113 = vsel %vm100, %v72, 0.0
    %114 = vadd.xlane.f32.xlu0 %v113
    %v115 = vpop.xlane.xlu0 %114
    %v116 = vsel %vm100, %v73, 0.0
    %117 = vadd.xlane.f32.xlu0 %v116
    %v118 = vpop.xlane.xlu0 %117
    %v119 = vsel %vm100, %v74, 0.0
    %120 = vadd.xlane.f32.xlu0 %v119
    %v121 = vpop.xlane.xlu0 %120
    %v122 = vsel %vm100, %v75, 0.0
    %123 = vadd.xlane.f32.xlu0 %v122
    %v124 = vpop.xlane.xlu0 %123
    %v125 = vsel %vm100, %v76, 0.0
    %126 = vadd.xlane.f32.xlu0 %v125
    %v127 = vpop.xlane.xlu0 %126
    %v128 = vsel %vm100, %v77, 0.0
    %129 = vadd.xlane.f32.xlu0 %v128
    %v130 = vpop.xlane.xlu0 %129
    %v131 = vsel %vm100, %v78, 0.0
    %132 = vadd.xlane.f32.xlu0 %v131
    %v133 = vpop.xlane.xlu0 %132
    %v134 = vsel %vm100, %v79, 0.0
    %135 = vadd.xlane.f32.xlu0 %v134
    %v136 = vpop.xlane.xlu0 %135
    %v137 = vsel %vm100, %v80, 0.0
    %138 = vadd.xlane.f32.xlu0 %v137
    %v139 = vpop.xlane.xlu0 %138
    %v140 = vsel %vm100, %v81, 0.0
    %141 = vadd.xlane.f32.xlu0 %v140
    %v142 = vpop.xlane.xlu0 %141
    %v143 = vsel %vm100, %v82, 0.0
    %144 = vadd.xlane.f32.xlu0 %v143
    %v145 = vpop.xlane.xlu0 %144
    %v146 = vsel %vm100, %v83, 0.0
    %147 = vadd.xlane.f32.xlu0 %v146
    %v148 = vpop.xlane.xlu0 %147
    %v149 = vsel %vm100, %v84, 0.0
    %150 = vadd.xlane.f32.xlu0 %v149
    %v151 = vpop.xlane.xlu0 %150
    %v152 = vsel %vm100, %v85, 0.0
    %153 = vadd.xlane.f32.xlu0 %v152
    %v154 = vpop.xlane.xlu0 %153
    %v155 = vsel %vm100, %v86, 0.0
    %156 = vadd.xlane.f32.xlu0 %v155
    %v157 = vpop.xlane.xlu0 %156
    %v158 = vsel %vm100, %v87, 0.0
    %159 = vadd.xlane.f32.xlu0 %v158
    %v160 = vpop.xlane.xlu0 %159
    %v161 = vsel %vm100, %v88, 0.0
    %162 = vadd.xlane.f32.xlu0 %v161
    %v163 = vpop.xlane.xlu0 %162
    %v164 = vsel %vm100, %v89, 0.0
    %165 = vadd.xlane.f32.xlu0 %v164
    %v166 = vpop.xlane.xlu0 %165
    %v167 = vsel %vm100, %v90, 0.0
    %168 = vadd.xlane.f32.xlu0 %v167
    %v169 = vpop.xlane.xlu0 %168
    %v170 = vsel %vm100, %v91, 0.0
    %171 = vadd.xlane.f32.xlu0 %v170
    %v172 = vpop.xlane.xlu0 %171
    %v173 = vsel %vm100, %v92, 0.0
    %174 = vadd.xlane.f32.xlu0 %v173
    %v175 = vpop.xlane.xlu0 %174
    %v176 = vsel %vm100, %v93, 0.0
    %177 = vadd.xlane.f32.xlu0 %v176
    %v178 = vpop.xlane.xlu0 %177
    %v179 = vsel %vm100, %v94, 0.0
    %180 = vadd.xlane.f32.xlu0 %v179
    %v181 = vpop.xlane.xlu0 %180
    %v182 = vsel %vm100, %v95, 0.0
    %183 = vadd.xlane.f32.xlu0 %v182
    %v184 = vpop.xlane.xlu0 %183
    %v185 = vsel %vm100, %v96, 0.0
    %186 = vadd.xlane.f32.xlu0 %v185
    %v187 = vpop.xlane.xlu0 %186
    %v188 = vsel %vm100, %v97, 0.0
    %189 = vadd.xlane.f32.xlu0 %v188
    %v190 = vpop.xlane.xlu0 %189
    %v191 = vsel %vm100, %v98, 0.0
    %192 = vadd.xlane.f32.xlu0 %v191
    %v193 = vpop.xlane.xlu0 %192
    %v194 = vsel %vm100, %v99, 0.0
    %195 = vadd.xlane.f32.xlu0 %v194
    %v196 = vpop.xlane.xlu0 %195
    %v197 = vrcp.pop 32.0
    %v198 = vmul.f32 %v103, %v197
    %v199 = vmul.f32 %v106, %v197
    %v200 = vmul.f32 %v109, %v197
    %v201 = vmul.f32 %v112, %v197
    %v202 = vmul.f32 %v115, %v197
    %v203 = vmul.f32 %v118, %v197
    %v204 = vmul.f32 %v121, %v197
    %v205 = vmul.f32 %v124, %v197
    %v206 = vmul.f32 %v127, %v197
    %v207 = vmul.f32 %v130, %v197
    %v208 = vmul.f32 %v133, %v197
    %v209 = vmul.f32 %v136, %v197
    %v210 = vmul.f32 %v139, %v197
    %v211 = vmul.f32 %v142, %v197
    %v212 = vmul.f32 %v145, %v197
    %v213 = vmul.f32 %v148, %v197
    %v214 = vmul.f32 %v151, %v197
    %v215 = vmul.f32 %v154, %v197
    %v216 = vmul.f32 %v157, %v197
    %v217 = vmul.f32 %v160, %v197
    %v218 = vmul.f32 %v163, %v197
    %v219 = vmul.f32 %v166, %v197
    %v220 = vmul.f32 %v169, %v197
    %v221 = vmul.f32 %v172, %v197
    %v222 = vmul.f32 %v175, %v197
    %v223 = vmul.f32 %v178, %v197
    %v224 = vmul.f32 %v181, %v197
    %v225 = vmul.f32 %v184, %v197
    %v226 = vmul.f32 %v187, %v197
    %v227 = vmul.f32 %v190, %v197
    %v228 = vmul.f32 %v193, %v197
    %v229 = vmul.f32 %v196, %v197
    %v230 = vsub.f32 %v68, %v198
    %v231 = vsub.f32 %v69, %v199
    %v232 = vsub.f32 %v70, %v200
    %v233 = vsub.f32 %v71, %v201
    %v234 = vsub.f32 %v72, %v202
    %v235 = vsub.f32 %v73, %v203
    %v236 = vsub.f32 %v74, %v204
    %v237 = vsub.f32 %v75, %v205
    %v238 = vsub.f32 %v76, %v206
    %v239 = vsub.f32 %v77, %v207
    %v240 = vsub.f32 %v78, %v208
    %v241 = vsub.f32 %v79, %v209
    %v242 = vsub.f32 %v80, %v210
    %v243 = vsub.f32 %v81, %v211
    %v244 = vsub.f32 %v82, %v212
    %v245 = vsub.f32 %v83, %v213
    %v246 = vsub.f32 %v84, %v214
    %v247 = vsub.f32 %v85, %v215
    %v248 = vsub.f32 %v86, %v216
    %v249 = vsub.f32 %v87, %v217
    %v250 = vsub.f32 %v88, %v218
    %v251 = vsub.f32 %v89, %v219
    %v252 = vsub.f32 %v90, %v220
    %v253 = vsub.f32 %v91, %v221
    %v254 = vsub.f32 %v92, %v222
    %v255 = vsub.f32 %v93, %v223
    %v256 = vsub.f32 %v94, %v224
    %v257 = vsub.f32 %v95, %v225
    %v258 = vsub.f32 %v96, %v226
    %v259 = vsub.f32 %v97, %v227
    %v260 = vsub.f32 %v98, %v228
    %v261 = vsub.f32 %v99, %v229
    %v262 = vmul.f32 %v230, %v230
    %v263 = vmul.f32 %v231, %v231
    %v264 = vmul.f32 %v232, %v232
    %v265 = vmul.f32 %v233, %v233
    %v266 = vmul.f32 %v234, %v234
    %v267 = vmul.f32 %v235, %v235
    %v268 = vmul.f32 %v236, %v236
    %v269 = vmul.f32 %v237, %v237
    %v270 = vmul.f32 %v238, %v238
    %v271 = vmul.f32 %v239, %v239
    %v272 = vmul.f32 %v240, %v240
    %v273 = vmul.f32 %v241, %v241
    %v274 = vmul.f32 %v242, %v242
    %v275 = vmul.f32 %v243, %v243
    %v276 = vmul.f32 %v244, %v244
    %v277 = vmul.f32 %v245, %v245
    %v278 = vmul.f32 %v246, %v246
    %v279 = vmul.f32 %v247, %v247
    %v280 = vmul.f32 %v248, %v248
    %v281 = vmul.f32 %v249, %v249
    %v282 = vmul.f32 %v250, %v250
    %v283 = vmul.f32 %v251, %v251
    %v284 = vmul.f32 %v252, %v252
    %v285 = vmul.f32 %v253, %v253
    %v286 = vmul.f32 %v254, %v254
    %v287 = vmul.f32 %v255, %v255
    %v288 = vmul.f32 %v256, %v256
    %v289 = vmul.f32 %v257, %v257
    %v290 = vmul.f32 %v258, %v258
    %v291 = vmul.f32 %v259, %v259
    %v292 = vmul.f32 %v260, %v260
    %v293 = vmul.f32 %v261, %v261
    %v294 = vsel %vm100, %v262, 0.0
    %295 = vadd.xlane.f32.xlu0 %v294
    %v296 = vpop.xlane.xlu0 %295
    %v297 = vsel %vm100, %v263, 0.0
    %298 = vadd.xlane.f32.xlu0 %v297
    %v299 = vpop.xlane.xlu0 %298
    %v300 = vsel %vm100, %v264, 0.0
    %301 = vadd.xlane.f32.xlu0 %v300
    %v302 = vpop.xlane.xlu0 %301
    %v303 = vsel %vm100, %v265, 0.0
    %304 = vadd.xlane.f32.xlu0 %v303
    %v305 = vpop.xlane.xlu0 %304
    %v306 = vsel %vm100, %v266, 0.0
    %307 = vadd.xlane.f32.xlu0 %v306
    %v308 = vpop.xlane.xlu0 %307
    %v309 = vsel %vm100, %v267, 0.0
    %310 = vadd.xlane.f32.xlu0 %v309
    %v311 = vpop.xlane.xlu0 %310
    %v312 = vsel %vm100, %v268, 0.0
    %313 = vadd.xlane.f32.xlu0 %v312
    %v314 = vpop.xlane.xlu0 %313
    %v315 = vsel %vm100, %v269, 0.0
    %316 = vadd.xlane.f32.xlu0 %v315
    %v317 = vpop.xlane.xlu0 %316
    %v318 = vsel %vm100, %v270, 0.0
    %319 = vadd.xlane.f32.xlu0 %v318
    %v320 = vpop.xlane.xlu0 %319
    %v321 = vsel %vm100, %v271, 0.0
    %322 = vadd.xlane.f32.xlu0 %v321
    %v323 = vpop.xlane.xlu0 %322
    %v324 = vsel %vm100, %v272, 0.0
    %325 = vadd.xlane.f32.xlu0 %v324
    %v326 = vpop.xlane.xlu0 %325
    %v327 = vsel %vm100, %v273, 0.0
    %328 = vadd.xlane.f32.xlu0 %v327
    %v329 = vpop.xlane.xlu0 %328
    %v330 = vsel %vm100, %v274, 0.0
    %331 = vadd.xlane.f32.xlu0 %v330
    %v332 = vpop.xlane.xlu0 %331
    %v333 = vsel %vm100, %v275, 0.0
    %334 = vadd.xlane.f32.xlu0 %v333
    %v335 = vpop.xlane.xlu0 %334
    %v336 = vsel %vm100, %v276, 0.0
    %337 = vadd.xlane.f32.xlu0 %v336
    %v338 = vpop.xlane.xlu0 %337
    %v339 = vsel %vm100, %v277, 0.0
    %340 = vadd.xlane.f32.xlu0 %v339
    %v341 = vpop.xlane.xlu0 %340
    %v342 = vsel %vm100, %v278, 0.0
    %343 = vadd.xlane.f32.xlu0 %v342
    %v344 = vpop.xlane.xlu0 %343
    %v345 = vsel %vm100, %v279, 0.0
    %346 = vadd.xlane.f32.xlu0 %v345
    %v347 = vpop.xlane.xlu0 %346
    %v348 = vsel %vm100, %v280, 0.0
    %349 = vadd.xlane.f32.xlu0 %v348
    %v350 = vpop.xlane.xlu0 %349
    %v351 = vsel %vm100, %v281, 0.0
    %352 = vadd.xlane.f32.xlu0 %v351
    %v353 = vpop.xlane.xlu0 %352
    %v354 = vsel %vm100, %v282, 0.0
    %355 = vadd.xlane.f32.xlu0 %v354
    %v356 = vpop.xlane.xlu0 %355
    %v357 = vsel %vm100, %v283, 0.0
    %358 = vadd.xlane.f32.xlu0 %v357
    %v359 = vpop.xlane.xlu0 %358
    %v360 = vsel %vm100, %v284, 0.0
    %361 = vadd.xlane.f32.xlu0 %v360
    %v362 = vpop.xlane.xlu0 %361
    %v363 = vsel %vm100, %v285, 0.0
    %364 = vadd.xlane.f32.xlu0 %v363
    %v365 = vpop.xlane.xlu0 %364
    %v366 = vsel %vm100, %v286, 0.0
    %367 = vadd.xlane.f32.xlu0 %v366
    %v368 = vpop.xlane.xlu0 %367
    %v369 = vsel %vm100, %v287, 0.0
    %370 = vadd.xlane.f32.xlu0 %v369
    %v371 = vpop.xlane.xlu0 %370
    %v372 = vsel %vm100, %v288, 0.0
    %373 = vadd.xlane.f32.xlu0 %v372
    %v374 = vpop.xlane.xlu0 %373
    %v375 = vsel %vm100, %v289, 0.0
    %376 = vadd.xlane.f32.xlu0 %v375
    %v377 = vpop.xlane.xlu0 %376
    %v378 = vsel %vm100, %v290, 0.0
    %379 = vadd.xlane.f32.xlu0 %v378
    %v380 = vpop.xlane.xlu0 %379
    %v381 = vsel %vm100, %v291, 0.0
    %382 = vadd.xlane.f32.xlu0 %v381
    %v383 = vpop.xlane.xlu0 %382
    %v384 = vsel %vm100, %v292, 0.0
    %385 = vadd.xlane.f32.xlu0 %v384
    %v386 = vpop.xlane.xlu0 %385
    %v387 = vsel %vm100, %v293, 0.0
    %388 = vadd.xlane.f32.xlu0 %v387
    %v389 = vpop.xlane.xlu0 %388
    %v390 = vmul.f32 %v296, %v197
    %v391 = vmul.f32 %v299, %v197
    %v392 = vmul.f32 %v302, %v197
    %v393 = vmul.f32 %v305, %v197
    %v394 = vmul.f32 %v308, %v197
    %v395 = vmul.f32 %v311, %v197
    %v396 = vmul.f32 %v314, %v197
    %v397 = vmul.f32 %v317, %v197
    %v398 = vmul.f32 %v320, %v197
    %v399 = vmul.f32 %v323, %v197
    %v400 = vmul.f32 %v326, %v197
    %v401 = vmul.f32 %v329, %v197
    %v402 = vmul.f32 %v332, %v197
    %v403 = vmul.f32 %v335, %v197
    %v404 = vmul.f32 %v338, %v197
    %v405 = vmul.f32 %v341, %v197
    %v406 = vmul.f32 %v344, %v197
    %v407 = vmul.f32 %v347, %v197
    %v408 = vmul.f32 %v350, %v197
    %v409 = vmul.f32 %v353, %v197
    %v410 = vmul.f32 %v356, %v197
    %v411 = vmul.f32 %v359, %v197
    %v412 = vmul.f32 %v362, %v197
    %v413 = vmul.f32 %v365, %v197
    %v414 = vmul.f32 %v368, %v197
    %v415 = vmul.f32 %v371, %v197
    %v416 = vmul.f32 %v374, %v197
    %v417 = vmul.f32 %v377, %v197
    %v418 = vmul.f32 %v380, %v197
    %v419 = vmul.f32 %v383, %v197
    %v420 = vmul.f32 %v386, %v197
    %v421 = vmul.f32 %v389, %v197
    %v422 = vadd.f32 %v390, 1e-05
    %v423 = vadd.f32 %v391, 1e-05
    %v424 = vadd.f32 %v392, 1e-05
    %v425 = vadd.f32 %v393, 1e-05
    %v426 = vadd.f32 %v394, 1e-05
    %v427 = vadd.f32 %v395, 1e-05
    %v428 = vadd.f32 %v396, 1e-05
    %v429 = vadd.f32 %v397, 1e-05
    %v430 = vadd.f32 %v398, 1e-05
    %v431 = vadd.f32 %v399, 1e-05
    %v432 = vadd.f32 %v400, 1e-05
    %v433 = vadd.f32 %v401, 1e-05
    %v434 = vadd.f32 %v402, 1e-05
    %v435 = vadd.f32 %v403, 1e-05
    %v436 = vadd.f32 %v404, 1e-05
    %v437 = vadd.f32 %v405, 1e-05
    %v438 = vadd.f32 %v406, 1e-05
    %v439 = vadd.f32 %v407, 1e-05
    %v440 = vadd.f32 %v408, 1e-05
    %v441 = vadd.f32 %v409, 1e-05
    %v442 = vadd.f32 %v410, 1e-05
    %v443 = vadd.f32 %v411, 1e-05
    %v444 = vadd.f32 %v412, 1e-05
    %v445 = vadd.f32 %v413, 1e-05
    %v446 = vadd.f32 %v414, 1e-05
    %v447 = vadd.f32 %v415, 1e-05
    %v448 = vadd.f32 %v416, 1e-05
    %v449 = vadd.f32 %v417, 1e-05
    %v450 = vadd.f32 %v418, 1e-05
    %v451 = vadd.f32 %v419, 1e-05
    %v452 = vadd.f32 %v420, 1e-05
    %v453 = vadd.f32 %v421, 1e-05
    %v454 = vrsqrt.pop %v422
    %v455 = vrsqrt.pop %v423
    %v456 = vrsqrt.pop %v424
    %v457 = vrsqrt.pop %v425
    %v458 = vrsqrt.pop %v426
    %v459 = vrsqrt.pop %v427
    %v460 = vrsqrt.pop %v428
    %v461 = vrsqrt.pop %v429
    %v462 = vrsqrt.pop %v430
    %v463 = vrsqrt.pop %v431
    %v464 = vrsqrt.pop %v432
    %v465 = vrsqrt.pop %v433
    %v466 = vrsqrt.pop %v434
    %v467 = vrsqrt.pop %v435
    %v468 = vrsqrt.pop %v436
    %v469 = vrsqrt.pop %v437
    %v470 = vrsqrt.pop %v438
    %v471 = vrsqrt.pop %v439
    %v472 = vrsqrt.pop %v440
    %v473 = vrsqrt.pop %v441
    %v474 = vrsqrt.pop %v442
    %v475 = vrsqrt.pop %v443
    %v476 = vrsqrt.pop %v444
    %v477 = vrsqrt.pop %v445
    %v478 = vrsqrt.pop %v446
    %v479 = vrsqrt.pop %v447
    %v480 = vrsqrt.pop %v448
    %v481 = vrsqrt.pop %v449
    %v482 = vrsqrt.pop %v450
    %v483 = vrsqrt.pop %v451
    %v484 = vrsqrt.pop %v452
    %v485 = vrsqrt.pop %v453
    %v486 = vmul.f32 %v230, %v454
    %v487 = vmul.f32 %v231, %v455
    %v488 = vmul.f32 %v232, %v456
    %v489 = vmul.f32 %v233, %v457
    %v490 = vmul.f32 %v234, %v458
    %v491 = vmul.f32 %v235, %v459
    %v492 = vmul.f32 %v236, %v460
    %v493 = vmul.f32 %v237, %v461
    %v494 = vmul.f32 %v238, %v462
    %v495 = vmul.f32 %v239, %v463
    %v496 = vmul.f32 %v240, %v464
    %v497 = vmul.f32 %v241, %v465
    %v498 = vmul.f32 %v242, %v466
    %v499 = vmul.f32 %v243, %v467
    %v500 = vmul.f32 %v244, %v468
    %v501 = vmul.f32 %v245, %v469
    %v502 = vmul.f32 %v246, %v470
    %v503 = vmul.f32 %v247, %v471
    %v504 = vmul.f32 %v248, %v472
    %v505 = vmul.f32 %v249, %v473
    %v506 = vmul.f32 %v250, %v474
    %v507 = vmul.f32 %v251, %v475
    %v508 = vmul.f32 %v252, %v476
    %v509 = vmul.f32 %v253, %v477
    %v510 = vmul.f32 %v254, %v478
    %v511 = vmul.f32 %v255, %v479
    %v512 = vmul.f32 %v256, %v480
    %v513 = vmul.f32 %v257, %v481
    %v514 = vmul.f32 %v258, %v482
    %v515 = vmul.f32 %v259, %v483
    %v516 = vmul.f32 %v260, %v484
    %v517 = vmul.f32 %v261, %v485
    %v518 = vld [vmem:[#allocation5] sm:$0x1]
    %v520 = vlaneseq
    %v521 = vshrl.u32 %v520, 7
    %v522 = vsub.s32 0, %v521
    %v523 = vrot.slane %v518, %v522
    %v525 = vmul.f32 %v486, %v523
    %v526 = vmul.f32 %v487, %v523
    %v527 = vmul.f32 %v488, %v523
    %v528 = vmul.f32 %v489, %v523
    %v529 = vmul.f32 %v490, %v523
    %v530 = vmul.f32 %v491, %v523
    %v531 = vmul.f32 %v492, %v523
    %v532 = vmul.f32 %v493, %v523
    %v533 = vmul.f32 %v494, %v523
    %v534 = vmul.f32 %v495, %v523
    %v535 = vmul.f32 %v496, %v523
    %v536 = vmul.f32 %v497, %v523
    %v537 = vmul.f32 %v498, %v523
    %v538 = vmul.f32 %v499, %v523
    %v539 = vmul.f32 %v500, %v523
    %v540 = vmul.f32 %v501, %v523
    %v541 = vmul.f32 %v502, %v523
    %v542 = vmul.f32 %v503, %v523
    %v543 = vmul.f32 %v504, %v523
    %v544 = vmul.f32 %v505, %v523
    %v545 = vmul.f32 %v506, %v523
    %v546 = vmul.f32 %v507, %v523
    %v547 = vmul.f32 %v508, %v523
    %v548 = vmul.f32 %v509, %v523
    %v549 = vmul.f32 %v510, %v523
    %v550 = vmul.f32 %v511, %v523
    %v551 = vmul.f32 %v512, %v523
    %v552 = vmul.f32 %v513, %v523
    %v553 = vmul.f32 %v514, %v523
    %v554 = vmul.f32 %v515, %v523
    %v555 = vmul.f32 %v516, %v523
    %v556 = vmul.f32 %v517, %v523
    %v557 = vld [vmem:[#allocation7] sm:$0x1]
    %v559 = vlaneseq
    %v560 = vshrl.u32 %v559, 7
    %v561 = vsub.s32 0, %v560
    %v562 = vrot.slane %v557, %v561
    %v564 = vadd.f32 %v525, %v562
    %v565 = vadd.f32 %v526, %v562
    %v566 = vadd.f32 %v527, %v562
    %v567 = vadd.f32 %v528, %v562
    %v568 = vadd.f32 %v529, %v562
    %v569 = vadd.f32 %v530, %v562
    %v570 = vadd.f32 %v531, %v562
    %v571 = vadd.f32 %v532, %v562
    %v572 = vadd.f32 %v533, %v562
    %v573 = vadd.f32 %v534, %v562
    %v574 = vadd.f32 %v535, %v562
    %v575 = vadd.f32 %v536, %v562
    %v576 = vadd.f32 %v537, %v562
    %v577 = vadd.f32 %v538, %v562
    %v578 = vadd.f32 %v539, %v562
    %v579 = vadd.f32 %v540, %v562
    %v580 = vadd.f32 %v541, %v562
    %v581 = vadd.f32 %v542, %v562
    %v582 = vadd.f32 %v543, %v562
    %v583 = vadd.f32 %v544, %v562
    %v584 = vadd.f32 %v545, %v562
    %v585 = vadd.f32 %v546, %v562
    %v586 = vadd.f32 %v547, %v562
    %v587 = vadd.f32 %v548, %v562
    %v588 = vadd.f32 %v549, %v562
    %v589 = vadd.f32 %v550, %v562
    %v590 = vadd.f32 %v551, %v562
    %v591 = vadd.f32 %v552, %v562
    %v592 = vadd.f32 %v553, %v562
    %v593 = vadd.f32 %v554, %v562
    %v594 = vadd.f32 %v555, %v562
    %v595 = vadd.f32 %v556, %v562
    %v596 = vld [vmem:[#allocation8] sm:$0x3]
    %v597 = vpack.c.bf16 %v565, %v564
    %v598 = vpack.c.bf16 %v567, %v566
    %v599 = vpack.c.bf16 %v569, %v568
    %v600 = vpack.c.bf16 %v571, %v570
    %v601 = vpack.c.bf16 %v573, %v572
    %v602 = vpack.c.bf16 %v575, %v574
    %v603 = vpack.c.bf16 %v577, %v576
    %v604 = vpack.c.bf16 %v579, %v578
    %v605 = vpack.c.bf16 %v581, %v580
    %v606 = vpack.c.bf16 %v583, %v582
    %v607 = vpack.c.bf16 %v585, %v584
    %v608 = vpack.c.bf16 %v587, %v586
    %v609 = vpack.c.bf16 %v589, %v588
    %v610 = vpack.c.bf16 %v591, %v590
    %v611 = vpack.c.bf16 %v593, %v592
    %v612 = vpack.c.bf16 %v595, %v594
    %v614 = vsel %vm100, %v596, 0
    %v617 = vsel %vm100, %v597, 0
    %v620 = vsel %vm100, %v598, 0
    %v623 = vsel %vm100, %v599, 0
    %v626 = vsel %vm100, %v600, 0
    %v629 = vsel %vm100, %v601, 0
    %v632 = vsel %vm100, %v602, 0
    %v635 = vsel %vm100, %v603, 0
    %v638 = vsel %vm100, %v604, 0
    %v641 = vsel %vm100, %v605, 0
    %v644 = vsel %vm100, %v606, 0
    %v647 = vsel %vm100, %v607, 0
    %v650 = vsel %vm100, %v608, 0
    %v653 = vsel %vm100, %v609, 0
    %v656 = vsel %vm100, %v610, 0
    %v659 = vsel %vm100, %v611, 0
    %v662 = vsel %vm100, %v612, 0
    %664 = vmatprep.subr.bf16.mxu0 0
    %665 = vmatpush1.bf16.xpose.msra.mxu0 %v617
    %666 = vmatprep.subr.bf16.mxu0 0
    %667 = vmatpush1.bf16.xpose.msra.mxu0 %v620
    %668 = vmatprep.subr.bf16.mxu0 0
    %669 = vmatpush1.bf16.xpose.msra.mxu0 %v623
    %670 = vmatprep.subr.bf16.mxu0 0
    %671 = vmatpush1.bf16.xpose.msra.mxu0 %v626
    %672 = vmatprep.subr.bf16.mxu0 0
    %673 = vmatpush1.bf16.xpose.msra.mxu0 %v629
    %674 = vmatprep.subr.bf16.mxu0 0
    %675 = vmatpush1.bf16.xpose.msra.mxu0 %v632
    %676 = vmatprep.subr.bf16.mxu0 0
    %677 = vmatpush1.bf16.xpose.msra.mxu0 %v635
    %678 = vmatprep.subr.bf16.mxu0 0
    %679 = vmatpush1.bf16.xpose.msra.mxu0 %v638
    %680 = vmatprep.subr.bf16.mxu0 0
    %681 = vmatpush1.bf16.xpose.msra.mxu0 %v641
    %682 = vmatprep.subr.bf16.mxu0 0
    %683 = vmatpush1.bf16.xpose.msra.mxu0 %v644
    %684 = vmatprep.subr.bf16.mxu0 0
    %685 = vmatpush1.bf16.xpose.msra.mxu0 %v647
    %686 = vmatprep.subr.bf16.mxu0 0
    %687 = vmatpush1.bf16.xpose.msra.mxu0 %v650
    %688 = vmatprep.subr.bf16.mxu0 0
    %689 = vmatpush1.bf16.xpose.msra.mxu0 %v653
    %690 = vmatprep.subr.bf16.mxu0 0
    %691 = vmatpush1.bf16.xpose.msra.mxu0 %v656
    %692 = vmatprep.subr.bf16.mxu0 0
    %693 = vmatpush1.bf16.xpose.msra.mxu0 %v659
    %694 = vmatprep.subr.bf16.mxu0 0
    %695 = vmatpush1.bf16.xpose.msra.mxu0 %v662
    %696 = vmatprep.mubr.bf16.mxu0 0
    %697 = vmatmul.mubr.bf16.gmra.mrb[0].mxu0 %v614
    %v698 = vpop.f32.mrb[0].mxu0
    %v699 = vadd.f32 0.0, %v698
    %v700 = vpop.f32.mrb[0].mxu0
    %v701 = vadd.f32 0.0, %v700
    %v702 = vpop.f32.mrb[0].mxu0
    %v703 = vpop.f32.mrb[0].mxu0
    %704 = vdwg.mxu0
    %v705 = vpack.c.bf16 %v699, %v699
    %v706 = vpack.c.bf16 %v701, %v701
    %v709 = vcombine.low %v705, %v706
    %v711 = vunpack.c.l.s4 1983009808
    %v712 = vunpack.c.0.s8 %v711
    %v713 = vlaneseq
    %v714 = vshrl.u32 %v713, 7
    %v715 = vsub.s32 %v712, %v714
    %v716 = vrot.slane %v709, %v715
    %718 = vst [vmem:[#allocation10] sm:$0xf] %v716
    // Predicated region
    $region34: #{tpu_custom_call.1} parent=1 // pred_check
      _
    $region35: #{tpu_custom_call.1} parent=1 // pred_check_branch
      %720 = sbr.rel (0) target = $region37
    $region36: #{tpu_custom_call.1} parent=1 // pred_region
      %s722 = ssub.s32 64, 64
      %723 = vsyncadd [#allocation4], %s722
      %s725 = sshll.u32 [#allocation10], 4
      %s726 = int_to_ptr.vmem [resolvable:$true] %s725
      %728 = dma.vmem_to_hbm [thread:$0]  %s726, 64, %s4, [#allocation4]
    $region37: #{tpu_custom_call.1} parent=1 // pred_fallthru
      _
    // Predicated region
    $region38: #{tpu_custom_call.1} parent=1 // pred_check
      _
    $region39: #{tpu_custom_call.1} parent=1 // pred_check_branch
      %730 = sbr.rel (0) target = $region41
    $region40: #{tpu_custom_call.1} parent=1 // pred_region
      %731 = dma.done [#allocation4], 64
    $region41: #{tpu_custom_call.1} parent=1 // pred_fallthru
      _
    %732 = vsyncpa [#allocation3], 1
    %733 = vsyncpa [#allocation6], 1
    %734 = vsyncpa [#allocation9], 1
    %735 = vsyncpa [#allocation4], 1

</llo_original>
